<compile_context>
chip_gen: v7x
topology: tpu7x:2x2x1
jax: 0.10.0
libtpu: 0.0.40
codegen_flags: <defaults>
</compile_context>

<pallas_src>
import functools
import math

import jax
import jax.numpy as jnp
from jax.experimental import pallas as pl
from jax.experimental.pallas import tpu as pltpu

_LANES = 128
_MAX_PACK_LANES = 512          # cap on lcm(H, 128) lane width for packed path
_MAX_TM = 8192                 # row cap per tile
_TILE_BYTES_TARGET = 8 << 20   # ~8 MiB input tile target
_VMEM_BUFFER_BUDGET = 40 << 20  # conservative fit budget (v7x: 64 MiB physical)
_VMEM_LIMIT_CAP = 48 << 20


def _layernorm_row_kernel(x_ref, g_ref, b_ref, o_ref, *, eps, inv_h):
    # x_ref: (TM, H) tile, g_ref/b_ref: (1, H) f32. Normalize along lanes.
    x = x_ref[...].astype(jnp.float32)
    mean = jnp.sum(x, axis=-1, keepdims=True) * inv_h
    centered = x - mean
    var = jnp.sum(centered * centered, axis=-1, keepdims=True) * inv_h
    inv_std = jax.lax.rsqrt(var + eps)                   # EUP slot, cheap
    out = g_ref[...] * (centered * inv_std) + b_ref[...]
    o_ref[...] = out.astype(o_ref.dtype)


def _layernorm_packed_kernel(x_ref, g_ref, b_ref, seg_ref, o_ref, *, eps, inv_h):
    # Lane-dense path: each lane-row packs p = lane_w // H independent groups.
    # Per-group sums via a block-diagonal 0/1 matrix on the MXU (resident VMEM
    # input, constant index_map) -> no cross-lane relayout, full-width stores.
    x = x_ref[...].astype(jnp.float32)                   # (TM, lane_w)
    seg = seg_ref[...]                                   # (lane_w, lane_w) f32
    mean = jnp.dot(x, seg, preferred_element_type=jnp.float32) * inv_h
    centered = x - mean
    var = jnp.dot(centered * centered, seg,
                  preferred_element_type=jnp.float32) * inv_h
    inv_std = jax.lax.rsqrt(var + eps)
    out = g_ref[...] * (centered * inv_std) + b_ref[...]
    o_ref[...] = out.astype(o_ref.dtype)


def layer_normalization(x, gamma, beta, eps=1e-08):
    """LayerNorm over trailing dims given by gamma.shape (= parameters_shape)."""
    param_shape = gamma.shape
    h = math.prod(param_shape) if param_shape else 1
    total = math.prod(x.shape) if x.shape else 1
    rows = total // h

    x2 = x.reshape(rows, h)

    # Lane-dense packing: view (rows, H) as (rows / p, lcm(H,128)) so loads /
    # stores are full-128-lane-multiple vectors. Pad rows to a multiple of p.
    pack = False
    lane_w = h
    if h % _LANES != 0:
        lane_w_c = h * _LANES // math.gcd(h, _LANES)     # lcm(H, 128)
        if lane_w_c <= _MAX_PACK_LANES:
            pack = True
            lane_w = lane_w_c

    if pack:
        p = lane_w // h
        rows_pad = ((rows + p - 1) // p) * p
        if rows_pad != rows:
            x2 = jnp.pad(x2, ((0, rows_pad - rows), (0, 0)))
        rows_eff = rows_pad // p
        x_in = x2.reshape(rows_eff, lane_w)
        g_in = jnp.tile(gamma.reshape(1, h).astype(jnp.float32), (1, p))
        b_in = jnp.tile(beta.reshape(1, h).astype(jnp.float32), (1, p))
        lane_idx = jnp.arange(lane_w, dtype=jnp.int32) // h
        seg = (lane_idx[:, None] == lane_idx[None, :]).astype(jnp.float32)
    else:
        rows_pad = rows
        rows_eff = rows
        x_in = x2
        g_in = gamma.reshape(1, h).astype(jnp.float32)
        b_in = beta.reshape(1, h).astype(jnp.float32)
        seg = None

    # ---- tile sizing ------------------------------------------------------
    itemsize = jnp.dtype(x.dtype).itemsize
    f32b = 4
    align = 8 * max(1, 4 // itemsize)                    # 8 f32 / 16 bf16 / 32 i8
    # Per-row VMEM: double-buffered in + out, plus ~3 f32 temporaries in-kernel.
    bytes_per_row = lane_w * (4 * itemsize + 3 * f32b)
    tm = min(_VMEM_BUFFER_BUDGET // bytes_per_row,
             _TILE_BYTES_TARGET // max(1, lane_w * itemsize),
             _MAX_TM)
    tm = max(align, (tm // align) * align)
    # Keep >= ~4 grid steps when rows allow it: shards across v7x's 2 TCs via
    # dimension_semantics=("parallel",) and keeps DMA/compute pipelined.
    quarter = (((rows_eff + 3) // 4 + align - 1) // align) * align
    tm = min(tm, quarter)
    if rows_eff <= align:
        tm = rows_eff                                    # full-extent first dim
    grid = (pl.cdiv(rows_eff, tm),)

    # ---- VMEM limit sized from actual buffers (cap for v7x 64 MiB) --------
    tile_bytes = tm * lane_w * itemsize
    seg_bytes = lane_w * lane_w * f32b if pack else 0
    est = (4 * tile_bytes                      # 2x in + 2x out (double-buffered)
           + 3 * tm * lane_w * f32b            # in-kernel f32 temporaries
           + seg_bytes + 4 * lane_w * f32b     # seg matrix + gamma/beta
           + (2 << 20))                        # Mosaic internal scratch margin
    vmem_limit = int(min(max(est, 8 << 20), _VMEM_LIMIT_CAP))

    if pack:
        kernel = functools.partial(_layernorm_packed_kernel,
                                   eps=float(eps), inv_h=1.0 / h)
        in_specs = [
            pl.BlockSpec((tm, lane_w), lambda i: (i, 0)),
            pl.BlockSpec((1, lane_w), lambda i: (0, 0)),
            pl.BlockSpec((1, lane_w), lambda i: (0, 0)),
            pl.BlockSpec((lane_w, lane_w), lambda i: (0, 0)),   # resident
        ]
        args = (x_in, g_in, b_in, seg)
    else:
        kernel = functools.partial(_layernorm_row_kernel,
                                   eps=float(eps), inv_h=1.0 / h)
        in_specs = [
            pl.BlockSpec((tm, lane_w), lambda i: (i, 0)),
            pl.BlockSpec((1, lane_w), lambda i: (0, 0)),
            pl.BlockSpec((1, lane_w), lambda i: (0, 0)),
        ]
        args = (x_in, g_in, b_in)

    out2 = pl.pallas_call(
        kernel,
        out_shape=jax.ShapeDtypeStruct((rows_eff, lane_w), x.dtype),
        grid_spec=pltpu.PrefetchScalarGridSpec(
            num_scalar_prefetch=0,
            grid=grid,
            in_specs=in_specs,
            out_specs=pl.BlockSpec((tm, lane_w), lambda i: (i, 0)),
        ),
        compiler_params=pltpu.CompilerParams(
            dimension_semantics=("parallel",),
            vmem_limit_bytes=vmem_limit,
        ),
    )(*args)

    if pack:
        out2 = out2.reshape(rows_pad, h)[:rows, :]
    return out2.reshape(x.shape)


def _reference_layernorm(x, gamma, beta, eps=1e-08):
    ndims = gamma.ndim
    axes = tuple(range(x.ndim - ndims, x.ndim))
    mean = jnp.mean(x, axis=axes, keepdims=True)
    var = jnp.mean((x - mean) ** 2, axis=axes, keepdims=True)
    std = jnp.sqrt(var + eps)
    return gamma * ((x - mean) / std) + beta


if __name__ == "__main__":
    key = jax.random.PRNGKey(0)
    eps = 1e-08

    def check(shape, pshape, k):
        xx = jax.random.normal(k, shape, dtype=jnp.float32)
        n = math.prod(pshape)
        g = (1.0 + 0.01 * jnp.arange(n, dtype=jnp.float32)).reshape(pshape)
        b = (0.1 * jnp.arange(n, dtype=jnp.float32)).reshape(pshape)
        out = jax.block_until_ready(layer_normalization(xx, g, b, eps=eps))
        ref = _reference_layernorm(xx, g, b, eps=eps)
        assert out.shape == xx.shape and out.dtype == xx.dtype
        err = float(jnp.max(jnp.abs(out - ref)))
        assert err < 5e-5, (shape, err)

    keys = jax.random.split(key, 4)
    # Primary module-sized case: batch=2, seq=8, hidden=32 (packed, lane_w=128).
    check((2, 8, 32), (32,), keys[0])
    # rows % p != 0 -> padded packed path (rows=21, p=4).
    check((3, 7, 32), (32,), keys[1])
    # H multiple of 128 -> row path with a ragged last grid block (rows=52).
    check((4, 13, 256), (256,), keys[2])
    # H not dividing 128 -> generalized packing (lane_w = lcm(192,128) = 384).
    check((2, 5, 192), (192,), keys[3])

    print("KERNEL_OK")
</pallas_src>

<mosaic_0001>
module attributes {stable_mosaic.version = 11 : i64} {
  func.func @_layernorm_packed_kernel(%arg0: i32, %arg1: memref<4x128xf32, #tpu.memory_space<vmem>>, %arg2: memref<1x128xf32, #tpu.memory_space<vmem>>, %arg3: memref<1x128xf32, #tpu.memory_space<vmem>>, %arg4: memref<128x128xf32, #tpu.memory_space<vmem>>, %arg5: memref<4x128xf32, #tpu.memory_space<vmem>>) attributes {dimension_semantics = [#tpu.dimension_semantics<parallel>], iteration_bounds = array<i64: 1>, scalar_prefetch = 0 : i64, scratch_operands = 0 : i64, tpu.core_type = #tpu.core_type<tc>, window_params = [{transform_indices = @transform_0, window_bounds = array<i64: 4, 128>}, {pipeline_mode = #tpu.pipeline_mode<synchronous>, transform_indices = @transform_1, window_bounds = array<i64: 1, 128>}, {pipeline_mode = #tpu.pipeline_mode<synchronous>, transform_indices = @transform_2, window_bounds = array<i64: 1, 128>}, {pipeline_mode = #tpu.pipeline_mode<synchronous>, transform_indices = @transform_3, window_bounds = array<i64: 128, 128>}, {transform_indices = @transform_4, window_bounds = array<i64: 4, 128>}]} {
    %c0 = arith.constant 0 : index
    %c0_0 = arith.constant 0 : index
    %0 = vector.load %arg1[%c0, %c0_0] : memref<4x128xf32, #tpu.memory_space<vmem>>, vector<4x128xf32>
    %c0_1 = arith.constant 0 : index
    %c0_2 = arith.constant 0 : index
    %1 = vector.load %arg4[%c0_1, %c0_2] : memref<128x128xf32, #tpu.memory_space<vmem>>, vector<128x128xf32>
    %cst = arith.constant dense<0.000000e+00> : vector<4x128xf32>
    %2 = tpu.matmul %0, %1, %cst {dimension_numbers = #tpu.dot_dimension_numbers<[1], [0], [0], [1], [0, 0, 1, 1], [], []>} : vector<4x128xf32>, vector<128x128xf32>, vector<4x128xf32> -> vector<4x128xf32>
    %cst_3 = arith.constant 3.125000e-02 : f32
    %3 = vector.broadcast %cst_3 : f32 to vector<4x128xf32>
    %4 = arith.mulf %2, %3 : vector<4x128xf32>
    %5 = arith.subf %0, %4 : vector<4x128xf32>
    %6 = arith.mulf %5, %5 : vector<4x128xf32>
    %cst_4 = arith.constant dense<0.000000e+00> : vector<4x128xf32>
    %7 = tpu.matmul %6, %1, %cst_4 {dimension_numbers = #tpu.dot_dimension_numbers<[1], [0], [0], [1], [0, 0, 1, 1], [], []>} : vector<4x128xf32>, vector<128x128xf32>, vector<4x128xf32> -> vector<4x128xf32>
    %cst_5 = arith.constant 3.125000e-02 : f32
    %8 = vector.broadcast %cst_5 : f32 to vector<4x128xf32>
    %9 = arith.mulf %7, %8 : vector<4x128xf32>
    %cst_6 = arith.constant 9.99999993E-9 : f32
    %10 = vector.broadcast %cst_6 : f32 to vector<4x128xf32>
    %11 = arith.addf %9, %10 : vector<4x128xf32>
    %12 = math.rsqrt %11 : vector<4x128xf32>
    %c0_7 = arith.constant 0 : index
    %c0_8 = arith.constant 0 : index
    %13 = vector.load %arg2[%c0_7, %c0_8] : memref<1x128xf32, #tpu.memory_space<vmem>>, vector<1x128xf32>
    %14 = arith.mulf %5, %12 : vector<4x128xf32>
    %15 = vector.broadcast %13 : vector<1x128xf32> to vector<4x128xf32>
    %16 = arith.mulf %15, %14 : vector<4x128xf32>
    %c0_9 = arith.constant 0 : index
    %c0_10 = arith.constant 0 : index
    %17 = vector.load %arg3[%c0_9, %c0_10] : memref<1x128xf32, #tpu.memory_space<vmem>>, vector<1x128xf32>
    %18 = vector.broadcast %17 : vector<1x128xf32> to vector<4x128xf32>
    %19 = arith.addf %16, %18 : vector<4x128xf32>
    %c0_11 = arith.constant 0 : index
    %c0_12 = arith.constant 0 : index
    %20 = vector.load %arg5[%c0_11, %c0_12] : memref<4x128xf32, #tpu.memory_space<vmem>>, vector<4x128xf32>
    tpu.vector_store %arg5[%c0_11, %c0_12], %19 {strides = array<i32>} : memref<4x128xf32, #tpu.memory_space<vmem>>, vector<4x128xf32>,
    return
  }
  func.func @transform_0(%arg0: i32) -> (i32, i32) {
    %c0_i32 = arith.constant 0 : i32
    %c0_i32_0 = arith.constant 0 : i32
    return %arg0, %c0_i32 : i32, i32
  }
  func.func @transform_1(%arg0: i32) -> (i32, i32) {
    %c0_i32 = arith.constant 0 : i32
    %c0_i32_0 = arith.constant 0 : i32
    %c0_i32_1 = arith.constant 0 : i32
    return %c0_i32, %c0_i32_0 : i32, i32
  }
  func.func @transform_2(%arg0: i32) -> (i32, i32) {
    %c0_i32 = arith.constant 0 : i32
    %c0_i32_0 = arith.constant 0 : i32
    %c0_i32_1 = arith.constant 0 : i32
    return %c0_i32, %c0_i32_0 : i32, i32
  }
  func.func @transform_3(%arg0: i32) -> (i32, i32) {
    %c0_i32 = arith.constant 0 : i32
    %c0_i32_0 = arith.constant 0 : i32
    %c0_i32_1 = arith.constant 0 : i32
    return %c0_i32, %c0_i32_0 : i32, i32
  }
  func.func @transform_4(%arg0: i32) -> (i32, i32) {
    %c0_i32 = arith.constant 0 : i32
    %c0_i32_0 = arith.constant 0 : i32
    return %arg0, %c0_i32 : i32, i32
  }
}

</mosaic_0001>

<llo_original>
// kernel: tpu_custom_call.1
$region0: #{tpu_custom_call.1}
  #allocation0 [shape = 'u32[]', space=smem, size = 0x4, offset = 0x4, fixed_abs, tag = 'smem constant byte address 0x4 - core index']
  #allocation1 [shape = 'u32[144,128]{1,0:T(1,128)}', space=vmem, size = 0x12000, scoped, tag = 'internal scratch']
  %s0 = inlined_call_operand.hbm [shape: f32[4,128], index: 0, kind: input, shape index: {}]
  %s1 = inlined_call_operand.vmem [shape: f32[1,128], index: 1, kind: input, shape index: {}]
  %s2 = inlined_call_operand.vmem [shape: f32[1,128], index: 2, kind: input, shape index: {}]
  %s3 = inlined_call_operand.hbm [shape: f32[128,128], index: 3, kind: input, shape index: {}]
  %s4 = inlined_call_operand.hbm [shape: f32[4,128], index: 4, kind: output, shape index: {}]
  %s5 = sld [smem:[#allocation0]]
  $region34: #{tpu_custom_call.1} parent=0
    _
  %s7 = ssub.s32 1, %s5
  %s8 = scalar_select 0, %s7, %s5
  $region1: #{tpu_custom_call.1} parent=0
    #allocation2 [shape = 'u8[2048]{0}', space=vmem, size = 0x800, scoped, tag = 'input window, operand 0, single buffered']
    #allocation3 [shape = 's32[1]{0}', space=sflag, size = 0x4, scoped, tag = 'scoped memory for tpu_custom_call.1']
    #allocation4 [shape = 's32[1]{0}', space=sflag, size = 0x4, scoped, tag = 'scoped memory for tpu_custom_call.1']
    #allocation5 [shape = 'u8[65536]{0}', space=vmem, size = 0x10000, scoped, tag = 'input window, operand 3, single buffered']
    #allocation6 [shape = 's32[1]{0}', space=sflag, size = 0x4, scoped, tag = 'scoped memory for tpu_custom_call.1']
    #allocation7 [shape = 'u8[2048]{0}', space=vmem, size = 0x800, scoped, tag = 'output window, operand 0, single buffered']
    %9 = vsyncpa [#allocation3], 0
    %10 = vsyncpa [#allocation6], 0
    %11 = vsyncpa [#allocation4], 0
    // Predicated region
    $region2: #{tpu_custom_call.1} parent=1 // pred_check
      _
    $region3: #{tpu_custom_call.1} parent=1 // pred_check_branch
      %13 = sbr.rel (0) target = $region5
    $region4: #{tpu_custom_call.1} parent=1 // pred_region
      %s15 = ssub.s32 64, 64
      %16 = vsyncadd [#allocation3], %s15
      %s18 = sshll.u32 [#allocation2], 4
      %s19 = int_to_ptr.vmem [resolvable:$true] %s18
      %21 = dma.hbm_to_vmem [thread:$0]  %s0, 64, %s19, [#allocation3]
    $region5: #{tpu_custom_call.1} parent=1 // pred_fallthru
      _
    // Predicated region
    $region6: #{tpu_custom_call.1} parent=1 // pred_check
      _
    $region7: #{tpu_custom_call.1} parent=1 // pred_check_branch
      %23 = sbr.rel (0) target = $region9
    $region8: #{tpu_custom_call.1} parent=1 // pred_region
      _
    $region9: #{tpu_custom_call.1} parent=1 // pred_fallthru
      _
    // Predicated region
    $region10: #{tpu_custom_call.1} parent=1 // pred_check
      _
    $region11: #{tpu_custom_call.1} parent=1 // pred_check_branch
      %25 = sbr.rel (0) target = $region13
    $region12: #{tpu_custom_call.1} parent=1 // pred_region
      _
    $region13: #{tpu_custom_call.1} parent=1 // pred_fallthru
      _
    // Predicated region
    $region14: #{tpu_custom_call.1} parent=1 // pred_check
      _
    $region15: #{tpu_custom_call.1} parent=1 // pred_check_branch
      %27 = sbr.rel (0) target = $region17
    $region16: #{tpu_custom_call.1} parent=1 // pred_region
      %s29 = ssub.s32 2048, 2048
      %30 = vsyncadd [#allocation6], %s29
      %s31 = sshll.u32 [#allocation5], 4
      %s32 = int_to_ptr.vmem [resolvable:$true] %s31
      %37 = dma.hbm_to_vmem [thread:$0]  %s3, 2048, %s32, [#allocation6], 128, 128, 8
    $region17: #{tpu_custom_call.1} parent=1 // pred_fallthru
      _
    // Predicated region
    $region18: #{tpu_custom_call.1} parent=1 // pred_check
      _
    $region19: #{tpu_custom_call.1} parent=1 // pred_check_branch
      %39 = sbr.rel (0) target = $region21
    $region20: #{tpu_custom_call.1} parent=1 // pred_region
      %40 = dma.done [#allocation3], 64
    $region21: #{tpu_custom_call.1} parent=1 // pred_fallthru
      _
    // Predicated region
    $region22: #{tpu_custom_call.1} parent=1 // pred_check
      _
    $region23: #{tpu_custom_call.1} parent=1 // pred_check_branch
      %42 = sbr.rel (0) target = $region25
    $region24: #{tpu_custom_call.1} parent=1 // pred_region
      %43 = dma.done [#allocation6], 2048
    $region25: #{tpu_custom_call.1} parent=1 // pred_fallthru
      _
    %v44 = vld [vmem:[#allocation2] sm:$0xf]
    %v45 = vld [vmem:[#allocation5] sm:$0xff]
    %v46 = vld [vmem:[#allocation5 + $0x8] sm:$0xff]
    %v47 = vld [vmem:[#allocation5 + $0x10] sm:$0xff]
    %v48 = vld [vmem:[#allocation5 + $0x18] sm:$0xff]
    %v49 = vld [vmem:[#allocation5 + $0x20] sm:$0xff]
    %v50 = vld [vmem:[#allocation5 + $0x28] sm:$0xff]
    %v51 = vld [vmem:[#allocation5 + $0x30] sm:$0xff]
    %v52 = vld [vmem:[#allocation5 + $0x38] sm:$0xff]
    %v53 = vld [vmem:[#allocation5 + $0x40] sm:$0xff]
    %v54 = vld [vmem:[#allocation5 + $0x48] sm:$0xff]
    %v55 = vld [vmem:[#allocation5 + $0x50] sm:$0xff]
    %v56 = vld [vmem:[#allocation5 + $0x58] sm:$0xff]
    %v57 = vld [vmem:[#allocation5 + $0x60] sm:$0xff]
    %v58 = vld [vmem:[#allocation5 + $0x68] sm:$0xff]
    %v59 = vld [vmem:[#allocation5 + $0x70] sm:$0xff]
    %v60 = vld [vmem:[#allocation5 + $0x78] sm:$0xff]
    %61 = vmatprep.subr.mxu0 0.0
    %62 = vmatpush1.msra.mxu0 %v45
    %63 = vmatprep.subr.mxu0 0.0
    %64 = vmatpush1.msra.mxu0 %v46
    %65 = vmatprep.subr.mxu0 0.0
    %66 = vmatpush1.msra.mxu0 %v47
    %67 = vmatprep.subr.mxu0 0.0
    %68 = vmatpush1.msra.mxu0 %v48
    %69 = vmatprep.subr.mxu0 0.0
    %70 = vmatpush1.msra.mxu0 %v49
    %71 = vmatprep.subr.mxu0 0.0
    %72 = vmatpush1.msra.mxu0 %v50
    %73 = vmatprep.subr.mxu0 0.0
    %74 = vmatpush1.msra.mxu0 %v51
    %75 = vmatprep.subr.mxu0 0.0
    %76 = vmatpush1.msra.mxu0 %v52
    %77 = vmatprep.subr.mxu0 0.0
    %78 = vmatpush1.msra.mxu0 %v53
    %79 = vmatprep.subr.mxu0 0.0
    %80 = vmatpush1.msra.mxu0 %v54
    %81 = vmatprep.subr.mxu0 0.0
    %82 = vmatpush1.msra.mxu0 %v55
    %83 = vmatprep.subr.mxu0 0.0
    %84 = vmatpush1.msra.mxu0 %v56
    %85 = vmatprep.subr.mxu0 0.0
    %86 = vmatpush1.msra.mxu0 %v57
    %87 = vmatprep.subr.mxu0 0.0
    %88 = vmatpush1.msra.mxu0 %v58
    %89 = vmatprep.subr.mxu0 0.0
    %90 = vmatpush1.msra.mxu0 %v59
    %91 = vmatprep.subr.mxu0 0.0
    %92 = vmatpush1.msra.mxu0 %v60
    %93 = vmatprep.subr.mxu0 0.0
    %94 = vmatpush1.msra.mxu0 0.0
    %95 = vmatprep.subr.mxu0 0.0
    %96 = vmatpush1.msra.mxu0 0.0
    %97 = vmatprep.subr.mxu0 0.0
    %98 = vmatpush1.msra.mxu0 0.0
    %99 = vmatprep.subr.mxu0 0.0
    %100 = vmatpush1.msra.mxu0 0.0
    %101 = vmatprep.subr.mxu0 0.0
    %102 = vmatpush1.msra.mxu0 0.0
    %103 = vmatprep.subr.mxu0 0.0
    %104 = vmatpush1.msra.mxu0 0.0
    %105 = vmatprep.subr.mxu0 0.0
    %106 = vmatpush1.msra.mxu0 0.0
    %107 = vmatprep.subr.mxu0 0.0
    %108 = vmatpush1.msra.mxu0 0.0
    %109 = vmatprep.subr.mxu0 0.0
    %110 = vmatpush1.msra.mxu0 0.0
    %111 = vmatprep.subr.mxu0 0.0
    %112 = vmatpush1.msra.mxu0 0.0
    %113 = vmatprep.subr.mxu0 0.0
    %114 = vmatpush1.msra.mxu0 0.0
    %115 = vmatprep.subr.mxu0 0.0
    %116 = vmatpush1.msra.mxu0 0.0
    %117 = vmatprep.subr.mxu0 0.0
    %118 = vmatpush1.msra.mxu0 0.0
    %119 = vmatprep.subr.mxu0 0.0
    %120 = vmatpush1.msra.mxu0 0.0
    %121 = vmatprep.subr.mxu0 0.0
    %122 = vmatpush1.msra.mxu0 0.0
    %123 = vmatprep.subr.mxu0 0.0
    %124 = vmatpush1.msra.mxu0 0.0
    %125 = vmatprep.mubr.f32.mxu0 0.0
    %126 = vmatmul.mubr.f32.gmra.mrb[0].mxu0 %v44
    %v127 = vpop.f32.mrb[0].mxu0
    %v128 = vadd.f32 0.0, %v127
    %v129 = vpop.f32.mrb[0].mxu0
    %130 = vdwg.mxu0
    %v131 = vmul.f32 %v128, 0.03125
    %v132 = vsub.f32 %v44, %v131
    %v133 = vmul.f32 %v132, %v132
    %134 = vmatprep.subr.mxu0 0.0
    %135 = vmatpush1.msra.mxu0 %v45
    %136 = vmatprep.subr.mxu0 0.0
    %137 = vmatpush1.msra.mxu0 %v46
    %138 = vmatprep.subr.mxu0 0.0
    %139 = vmatpush1.msra.mxu0 %v47
    %140 = vmatprep.subr.mxu0 0.0
    %141 = vmatpush1.msra.mxu0 %v48
    %142 = vmatprep.subr.mxu0 0.0
    %143 = vmatpush1.msra.mxu0 %v49
    %144 = vmatprep.subr.mxu0 0.0
    %145 = vmatpush1.msra.mxu0 %v50
    %146 = vmatprep.subr.mxu0 0.0
    %147 = vmatpush1.msra.mxu0 %v51
    %148 = vmatprep.subr.mxu0 0.0
    %149 = vmatpush1.msra.mxu0 %v52
    %150 = vmatprep.subr.mxu0 0.0
    %151 = vmatpush1.msra.mxu0 %v53
    %152 = vmatprep.subr.mxu0 0.0
    %153 = vmatpush1.msra.mxu0 %v54
    %154 = vmatprep.subr.mxu0 0.0
    %155 = vmatpush1.msra.mxu0 %v55
    %156 = vmatprep.subr.mxu0 0.0
    %157 = vmatpush1.msra.mxu0 %v56
    %158 = vmatprep.subr.mxu0 0.0
    %159 = vmatpush1.msra.mxu0 %v57
    %160 = vmatprep.subr.mxu0 0.0
    %161 = vmatpush1.msra.mxu0 %v58
    %162 = vmatprep.subr.mxu0 0.0
    %163 = vmatpush1.msra.mxu0 %v59
    %164 = vmatprep.subr.mxu0 0.0
    %165 = vmatpush1.msra.mxu0 %v60
    %166 = vmatprep.subr.mxu0 0.0
    %167 = vmatpush1.msra.mxu0 0.0
    %168 = vmatprep.subr.mxu0 0.0
    %169 = vmatpush1.msra.mxu0 0.0
    %170 = vmatprep.subr.mxu0 0.0
    %171 = vmatpush1.msra.mxu0 0.0
    %172 = vmatprep.subr.mxu0 0.0
    %173 = vmatpush1.msra.mxu0 0.0
    %174 = vmatprep.subr.mxu0 0.0
    %175 = vmatpush1.msra.mxu0 0.0
    %176 = vmatprep.subr.mxu0 0.0
    %177 = vmatpush1.msra.mxu0 0.0
    %178 = vmatprep.subr.mxu0 0.0
    %179 = vmatpush1.msra.mxu0 0.0
    %180 = vmatprep.subr.mxu0 0.0
    %181 = vmatpush1.msra.mxu0 0.0
    %182 = vmatprep.subr.mxu0 0.0
    %183 = vmatpush1.msra.mxu0 0.0
    %184 = vmatprep.subr.mxu0 0.0
    %185 = vmatpush1.msra.mxu0 0.0
    %186 = vmatprep.subr.mxu0 0.0
    %187 = vmatpush1.msra.mxu0 0.0
    %188 = vmatprep.subr.mxu0 0.0
    %189 = vmatpush1.msra.mxu0 0.0
    %190 = vmatprep.subr.mxu0 0.0
    %191 = vmatpush1.msra.mxu0 0.0
    %192 = vmatprep.subr.mxu0 0.0
    %193 = vmatpush1.msra.mxu0 0.0
    %194 = vmatprep.subr.mxu0 0.0
    %195 = vmatpush1.msra.mxu0 0.0
    %196 = vmatprep.subr.mxu0 0.0
    %197 = vmatpush1.msra.mxu0 0.0
    %198 = vmatprep.mubr.f32.mxu0 0.0
    %199 = vmatmul.mubr.f32.gmra.mrb[0].mxu0 %v133
    %v200 = vpop.f32.mrb[0].mxu0
    %v201 = vadd.f32 0.0, %v200
    %v202 = vpop.f32.mrb[0].mxu0
    %203 = vdwg.mxu0
    %v204 = vmul.f32 %v201, 0.03125
    %v205 = vadd.f32 %v204, 1e-08
    %v206 = vrsqrt.pop %v205
    %v207 = vld [vmem:[%s1] sm:$0x1]
    %v208 = vmul.f32 %v132, %v206
    %v210 = vlaneseq
    %v211 = vshrl.u32 %v210, 7
    %v212 = vsub.s32 0, %v211
    %v213 = vrot.slane %v207, %v212
    %v215 = vmul.f32 %v213, %v208
    %v216 = vld [vmem:[%s2] sm:$0x1]
    %v218 = vlaneseq
    %v219 = vshrl.u32 %v218, 7
    %v220 = vsub.s32 0, %v219
    %v221 = vrot.slane %v216, %v220
    %v223 = vadd.f32 %v215, %v221
    %224 = vst [vmem:[#allocation7] sm:$0xf] %v223
    // Predicated region
    $region26: #{tpu_custom_call.1} parent=1 // pred_check
      _
    $region27: #{tpu_custom_call.1} parent=1 // pred_check_branch
      %226 = sbr.rel (0) target = $region29
    $region28: #{tpu_custom_call.1} parent=1 // pred_region
      %s228 = ssub.s32 64, 64
      %229 = vsyncadd [#allocation4], %s228
      %s231 = sshll.u32 [#allocation7], 4
      %s232 = int_to_ptr.vmem [resolvable:$true] %s231
      %234 = dma.vmem_to_hbm [thread:$0]  %s232, 64, %s4, [#allocation4]
    $region29: #{tpu_custom_call.1} parent=1 // pred_fallthru
      _
    // Predicated region
    $region30: #{tpu_custom_call.1} parent=1 // pred_check
      _
    $region31: #{tpu_custom_call.1} parent=1 // pred_check_branch
      %236 = sbr.rel (0) target = $region33
    $region32: #{tpu_custom_call.1} parent=1 // pred_region
      %237 = dma.done [#allocation4], 64
    $region33: #{tpu_custom_call.1} parent=1 // pred_fallthru
      _
    %238 = vsyncpa [#allocation3], 1
    %239 = vsyncpa [#allocation6], 1
    %240 = vsyncpa [#allocation4], 1

</llo_original>
